<compile_context>
chip_gen: v5e
topology: v5e:2x2
jax: 0.10.0
libtpu: 0.0.40
codegen_flags: <defaults>
</compile_context>

<pallas_src>
import jax
import jax.numpy as jnp
from jax.experimental import pallas as pl
from jax.experimental.pallas import tpu as pltpu

HIDDEN = 32              # hidden_dims = [32, 32]
FUSED_H = 2 * HIDDEN     # fused hidden width (both MLPs side by side)
IN_DIM = 4               # weights-MLP input (abscs-MLP uses features 1:4)
OUT_W = 5                # weights-MLP output (softmax over gases)
OUT_A = 5                # abscs output (row 0 exactly 0, rows 1:5 = exp(mlp_abscs))
OUT_PAD = 16             # fused layer-3 rows, padded for 8-sublane alignment
ABS_ROW0 = 8             # abscs logits live in padded rows [8, 13)


# ------------------------------- kernel ------------------------------------
def _wsgg_kernel(x_ref, w1_ref, b1_ref, w2_ref, b2_ref, w3_ref, b3_ref,
                 weights_ref, abscs_ref):
    # x_ref: (IN_DIM, TB) f32; normalization is pre-folded into w1/b1.
    x = x_ref[...]
    w1 = w1_ref[...]                                  # (FUSED_H, 4) f32

    # ---- Layer 1 on the VPU: K=4 contraction as unrolled broadcast FMAs ----
    h = (b1_ref[...]
         + w1[:, 0:1] * x[0:1, :]
         + w1[:, 1:2] * x[1:2, :]
         + w1[:, 2:3] * x[2:3, :]
         + w1[:, 3:4] * x[3:4, :])                    # (FUSED_H, TB) f32
    h = jnp.tanh(h)

    # ---- Layers 2 & 3 on the MXU in bf16 (f32 accumulate / bias / tanh) ----
    h = jnp.dot(w2_ref[...], h.astype(jnp.bfloat16),
                preferred_element_type=jnp.float32) + b2_ref[...]
    h = jnp.tanh(h)
    z = jnp.dot(w3_ref[...], h.astype(jnp.bfloat16),
                preferred_element_type=jnp.float32) + b3_ref[...]   # (16, TB)

    # weights = softmax over rows 0..4 (tile-aligned slice, per batch column).
    logits_w = z[0:OUT_W, :]
    m = jnp.max(logits_w, axis=0, keepdims=True)
    e = jnp.exp(logits_w - m)
    denom = jnp.sum(e, axis=0, keepdims=True)
    inv = pl.reciprocal(denom, approx=True)
    inv = inv * (2.0 - denom * inv)                   # one Newton step
    weights_ref[...] = (e * inv).astype(weights_ref.dtype)

    # abscs: rows 8..12; row 8 has zero weights and a -1e30 bias -> exp == 0
    # exactly (matches `abscs[:, 0] = 0` in the reference).
    abscs_ref[...] = jnp.exp(z[ABS_ROW0:ABS_ROW0 + OUT_A, :]).astype(abscs_ref.dtype)


# ------------------------------- wrappers -----------------------------------
def _choose_tile(n, tile_b):
    """Pick a batch tile: multiple of 128 (or n), dividing n, >=2 grid steps."""
    t = min(tile_b, n)
    if n >= 256:                                  # aim for >=2 steps (v7x megacore)
        t = min(t, max(128, (n // 2) // 128 * 128))
    if t == n or (n % t == 0 and t % 128 == 0):
        return t
    best = None
    d = 128
    while d <= t:
        if n % d == 0:
            best = d
        d += 128
    return best if best is not None else n


def nn_wsgg_forward_t(x_t, folded_params, *, tile_b=8192):
    """Transposed (fast) path.  x_t: (4, N) f32 -> (weights (5,N), abscs (5,N))."""
    F, N = x_t.shape
    assert F == IN_DIM
    tile_b = _choose_tile(N, tile_b)
    w1, b1, w2, b2, w3, b3 = folded_params

    def full(arr):
        return pl.BlockSpec(arr.shape, lambda i: (0,) * arr.ndim)

    grid_spec = pltpu.PrefetchScalarGridSpec(
        num_scalar_prefetch=0,
        grid=(N // tile_b,),
        in_specs=[
            pl.BlockSpec((IN_DIM, tile_b), lambda i: (0, i)),   # x tile
            full(w1), full(b1), full(w2), full(b2), full(w3), full(b3),
        ],
        out_specs=[
            pl.BlockSpec((OUT_W, tile_b), lambda i: (0, i)),
            pl.BlockSpec((OUT_A, tile_b), lambda i: (0, i)),
        ],
    )
    weights_t, abscs_t = pl.pallas_call(
        _wsgg_kernel,
        out_shape=(jax.ShapeDtypeStruct((OUT_W, N), jnp.float32),
                   jax.ShapeDtypeStruct((OUT_A, N), jnp.float32)),
        grid_spec=grid_spec,
        compiler_params=pltpu.CompilerParams(
            dimension_semantics=("parallel",),
            # Raises v5e's 16 MiB default; matches v6e/v7x default, safely
            # under v7x's 64 MiB physical VMEM.
            vmem_limit_bytes=32 * 1024 * 1024),
    )(x_t, w1, b1, w2, b2, w3, b3)
    return weights_t, abscs_t


def nn_wsgg_forward(x, folded_params, *, tile_b=8192):
    """PyTorch-layout path.  x: (N, 4) f32 -> (weights (N, 5), abscs (N, 5))."""
    weights_t, abscs_t = nn_wsgg_forward_t(x.T, folded_params, tile_b=tile_b)
    return weights_t.T, abscs_t.T


# ------------------------- parameter construction --------------------------
def _init_linear(key, fan_in, fan_out):
    # Mirrors torch.nn.Linear default init: U(-1/sqrt(fan_in), 1/sqrt(fan_in)).
    kw, kb = jax.random.split(key)
    bound = 1.0 / (fan_in ** 0.5)
    W = jax.random.uniform(kw, (fan_out, fan_in), jnp.float32, -bound, bound)
    b = jax.random.uniform(kb, (fan_out,), jnp.float32, -bound, bound)
    return W, b


def make_params(key):
    """Returns (fused_params, raw_params).  w2/w3 stored in bf16 for the MXU."""
    ks = jax.random.split(key, 6)
    # mlp_weights: 4 -> 32 -> 32 -> 5
    W1w, b1w = _init_linear(ks[0], IN_DIM, HIDDEN)
    W2w, b2w = _init_linear(ks[1], HIDDEN, HIDDEN)
    W3w, b3w = _init_linear(ks[2], HIDDEN, OUT_W)
    # mlp_abscs: 3 -> 32 -> 32 -> 4
    W1a, b1a = _init_linear(ks[3], IN_DIM - 1, HIDDEN)
    W2a, b2a = _init_linear(ks[4], HIDDEN, HIDDEN)
    W3a, b3a = _init_linear(ks[5], HIDDEN, OUT_A - 1)
    raw = (W1w, b1w, W2w, b2w, W3w, b3w, W1a, b1a, W2a, b2a, W3a, b3a)

    zH = jnp.zeros((HIDDEN, HIDDEN), jnp.float32)
    # Layer 1 (stays f32, runs on the VPU; normalization gets folded here):
    # abscs branch ignores feature 0 (zero column prepended).
    W1a_p = jnp.concatenate([jnp.zeros((HIDDEN, 1), jnp.float32), W1a], axis=1)
    w1f = jnp.concatenate([W1w, W1a_p], axis=0)                         # (2H, 4)
    b1f = jnp.concatenate([b1w, b1a]).reshape(FUSED_H, 1)
    # Layer 2: block-diagonal so the two branches stay independent.
    w2f = jnp.block([[W2w, zH], [zH, W2a]]).astype(jnp.bfloat16)        # (2H, 2H)
    b2f = jnp.concatenate([b2w, b2a]).reshape(FUSED_H, 1)
    # Layer 3: padded to 16 rows for sublane-tile-aligned output slices.
    #   rows 0..4  : weights logits
    #   row  8     : abscs row 0 -> zero weights + (-1e30) bias -> exp == 0
    #   rows 9..12 : abscs logits
    #   other rows : zero padding (never read)
    w3f = jnp.zeros((OUT_PAD, FUSED_H), jnp.float32)
    w3f = w3f.at[0:OUT_W, 0:HIDDEN].set(W3w)
    w3f = w3f.at[ABS_ROW0 + 1:ABS_ROW0 + OUT_A, HIDDEN:].set(W3a)
    w3f = w3f.astype(jnp.bfloat16)
    b3f = jnp.zeros((OUT_PAD,), jnp.float32)
    b3f = b3f.at[0:OUT_W].set(b3w)
    b3f = b3f.at[ABS_ROW0].set(-1e30)
    b3f = b3f.at[ABS_ROW0 + 1:ABS_ROW0 + OUT_A].set(b3a)
    b3f = b3f.reshape(OUT_PAD, 1)
    fused = (w1f, b1f, w2f, b2f, w3f, b3f)
    return fused, raw


def fold_normalization(fused_params, x_mean, x_std):
    """Fold (x - mean) / std into the first fused layer (one-time transform)."""
    w1f, b1f, w2f, b2f, w3f, b3f = fused_params
    mean = jnp.asarray(x_mean, jnp.float32).reshape(IN_DIM, 1)
    inv_std = 1.0 / jnp.asarray(x_std, jnp.float32).reshape(IN_DIM, 1)
    w1_eff = w1f * inv_std.T                      # scale columns by 1/std
    b1_eff = b1f - w1_eff @ mean                  # absorb the mean shift
    return (w1_eff, b1_eff, w2f, b2f, w3f, b3f)


# ------------------------------ reference ----------------------------------
def reference_forward(x, raw_params, x_mean, x_std):
    (W1w, b1w, W2w, b2w, W3w, b3w, W1a, b1a, W2a, b2a, W3a, b3a) = raw_params
    xn = (x - x_mean) / x_std
    h = jnp.tanh(xn @ W1w.T + b1w)
    h = jnp.tanh(h @ W2w.T + b2w)
    weights = jax.nn.softmax(h @ W3w.T + b3w, axis=1)
    g = jnp.tanh(xn[:, 1:] @ W1a.T + b1a)
    g = jnp.tanh(g @ W2a.T + b2a)
    abscs = jnp.zeros_like(weights)
    abscs = abscs.at[:, 1:].set(jnp.exp(g @ W3a.T + b3a))
    return weights, abscs


if __name__ == "__main__":
    key = jax.random.PRNGKey(0)
    kx, km, ks, kp = jax.random.split(key, 4)

    N = 512                                       # small demo batch (2 grid steps)
    x = jax.random.normal(kx, (N, IN_DIM), jnp.float32)
    x_mean = jax.random.normal(km, (1, IN_DIM), jnp.float32)
    x_std = jax.random.uniform(ks, (1, IN_DIM), jnp.float32, 0.5, 1.5)

    fused_params, raw_params = make_params(kp)
    folded_params = fold_normalization(fused_params, x_mean, x_std)

    weights, abscs = nn_wsgg_forward(x, folded_params)
    jax.block_until_ready((weights, abscs))

    # Transposed (layout-overhead-free) path must agree with the standard path.
    w_t, a_t = nn_wsgg_forward_t(x.T, folded_params)
    jax.block_until_ready((w_t, a_t))
    assert jnp.allclose(weights, w_t.T) and jnp.allclose(abscs, a_t.T)

    w_ref, a_ref = reference_forward(x, raw_params, x_mean, x_std)
    # bf16 MXU path: expect ~1e-3 level error vs the f32 reference.
    assert jnp.allclose(weights, w_ref, atol=2e-2, rtol=2e-2)
    assert jnp.allclose(abscs, a_ref, atol=2e-2, rtol=2e-2)
    assert jnp.all(abscs[:, 0] == 0.0)
    # approx reciprocal + Newton -> softmax rows sum to 1 within ~1e-6.
    assert jnp.allclose(jnp.sum(weights, axis=1), 1.0, atol=1e-4)

    print("KERNEL_OK")
</pallas_src>

<mosaic_0001>
module attributes {stable_mosaic.version = 11 : i64} {
  func.func @_wsgg_kernel(%arg0: i32, %arg1: memref<4x256xf32, #tpu.memory_space<vmem>>, %arg2: memref<64x4xf32, #tpu.memory_space<vmem>>, %arg3: memref<64x1xf32, #tpu.memory_space<vmem>>, %arg4: memref<64x64xbf16, #tpu.memory_space<vmem>>, %arg5: memref<64x1xf32, #tpu.memory_space<vmem>>, %arg6: memref<16x64xbf16, #tpu.memory_space<vmem>>, %arg7: memref<16x1xf32, #tpu.memory_space<vmem>>, %arg8: memref<5x256xf32, #tpu.memory_space<vmem>>, %arg9: memref<5x256xf32, #tpu.memory_space<vmem>>) attributes {dimension_semantics = [#tpu.dimension_semantics<parallel>], iteration_bounds = array<i64: 2>, scalar_prefetch = 0 : i64, scratch_operands = 0 : i64, tpu.core_type = #tpu.core_type<tc>, window_params = [{transform_indices = @transform_0, window_bounds = array<i64: 4, 256>}, {pipeline_mode = #tpu.pipeline_mode<synchronous>, transform_indices = @transform_1, window_bounds = array<i64: 64, 4>}, {pipeline_mode = #tpu.pipeline_mode<synchronous>, transform_indices = @transform_2, window_bounds = array<i64: 64, 1>}, {pipeline_mode = #tpu.pipeline_mode<synchronous>, transform_indices = @transform_3, window_bounds = array<i64: 64, 64>}, {pipeline_mode = #tpu.pipeline_mode<synchronous>, transform_indices = @transform_4, window_bounds = array<i64: 64, 1>}, {pipeline_mode = #tpu.pipeline_mode<synchronous>, transform_indices = @transform_5, window_bounds = array<i64: 16, 64>}, {pipeline_mode = #tpu.pipeline_mode<synchronous>, transform_indices = @transform_6, window_bounds = array<i64: 16, 1>}, {transform_indices = @transform_7, window_bounds = array<i64: 5, 256>}, {transform_indices = @transform_8, window_bounds = array<i64: 5, 256>}]} {
    %c0 = arith.constant 0 : index
    %c0_0 = arith.constant 0 : index
    %0 = vector.load %arg1[%c0, %c0_0] : memref<4x256xf32, #tpu.memory_space<vmem>>, vector<4x256xf32>
    %c0_1 = arith.constant 0 : index
    %c0_2 = arith.constant 0 : index
    %1 = vector.load %arg2[%c0_1, %c0_2] : memref<64x4xf32, #tpu.memory_space<vmem>>, vector<64x4xf32>
    %c0_3 = arith.constant 0 : index
    %c0_4 = arith.constant 0 : index
    %2 = vector.load %arg3[%c0_3, %c0_4] : memref<64x1xf32, #tpu.memory_space<vmem>>, vector<64x1xf32>
    %3 = vector.extract_strided_slice %1 {offsets = [0, 0], sizes = [64, 1], strides = [1, 1]} : vector<64x4xf32> to vector<64x1xf32>
    %4 = vector.extract_strided_slice %0 {offsets = [0, 0], sizes = [1, 256], strides = [1, 1]} : vector<4x256xf32> to vector<1x256xf32>
    %5 = vector.broadcast %3 : vector<64x1xf32> to vector<64x256xf32>
    %6 = vector.broadcast %4 : vector<1x256xf32> to vector<64x256xf32>
    %7 = arith.mulf %5, %6 : vector<64x256xf32>
    %8 = vector.broadcast %2 : vector<64x1xf32> to vector<64x256xf32>
    %9 = arith.addf %8, %7 : vector<64x256xf32>
    %10 = vector.extract_strided_slice %1 {offsets = [0, 1], sizes = [64, 1], strides = [1, 1]} : vector<64x4xf32> to vector<64x1xf32>
    %11 = vector.extract_strided_slice %0 {offsets = [1, 0], sizes = [1, 256], strides = [1, 1]} : vector<4x256xf32> to vector<1x256xf32>
    %12 = vector.broadcast %10 : vector<64x1xf32> to vector<64x256xf32>
    %13 = vector.broadcast %11 : vector<1x256xf32> to vector<64x256xf32>
    %14 = arith.mulf %12, %13 : vector<64x256xf32>
    %15 = arith.addf %9, %14 : vector<64x256xf32>
    %16 = vector.extract_strided_slice %1 {offsets = [0, 2], sizes = [64, 1], strides = [1, 1]} : vector<64x4xf32> to vector<64x1xf32>
    %17 = vector.extract_strided_slice %0 {offsets = [2, 0], sizes = [1, 256], strides = [1, 1]} : vector<4x256xf32> to vector<1x256xf32>
    %18 = vector.broadcast %16 : vector<64x1xf32> to vector<64x256xf32>
    %19 = vector.broadcast %17 : vector<1x256xf32> to vector<64x256xf32>
    %20 = arith.mulf %18, %19 : vector<64x256xf32>
    %21 = arith.addf %15, %20 : vector<64x256xf32>
    %22 = vector.extract_strided_slice %1 {offsets = [0, 3], sizes = [64, 1], strides = [1, 1]} : vector<64x4xf32> to vector<64x1xf32>
    %23 = vector.extract_strided_slice %0 {offsets = [3, 0], sizes = [1, 256], strides = [1, 1]} : vector<4x256xf32> to vector<1x256xf32>
    %24 = vector.broadcast %22 : vector<64x1xf32> to vector<64x256xf32>
    %25 = vector.broadcast %23 : vector<1x256xf32> to vector<64x256xf32>
    %26 = arith.mulf %24, %25 : vector<64x256xf32>
    %27 = arith.addf %21, %26 : vector<64x256xf32>
    %28 = math.tanh %27 : vector<64x256xf32>
    %c0_5 = arith.constant 0 : index
    %c0_6 = arith.constant 0 : index
    %29 = vector.load %arg4[%c0_5, %c0_6] : memref<64x64xbf16, #tpu.memory_space<vmem>>, vector<64x64xbf16>
    %30 = arith.truncf %28 : vector<64x256xf32> to vector<64x256xbf16>
    %cst = arith.constant dense<0.000000e+00> : vector<64x256xf32>
    %31 = tpu.matmul %29, %30, %cst {dimension_numbers = #tpu.dot_dimension_numbers<[1], [0], [0], [1], [0, 0, 1, 1], [], []>} : vector<64x64xbf16>, vector<64x256xbf16>, vector<64x256xf32> -> vector<64x256xf32>
    %c0_7 = arith.constant 0 : index
    %c0_8 = arith.constant 0 : index
    %32 = vector.load %arg5[%c0_7, %c0_8] : memref<64x1xf32, #tpu.memory_space<vmem>>, vector<64x1xf32>
    %33 = vector.broadcast %32 : vector<64x1xf32> to vector<64x256xf32>
    %34 = arith.addf %31, %33 : vector<64x256xf32>
    %35 = math.tanh %34 : vector<64x256xf32>
    %c0_9 = arith.constant 0 : index
    %c0_10 = arith.constant 0 : index
    %36 = vector.load %arg6[%c0_9, %c0_10] : memref<16x64xbf16, #tpu.memory_space<vmem>>, vector<16x64xbf16>
    %37 = arith.truncf %35 : vector<64x256xf32> to vector<64x256xbf16>
    %cst_11 = arith.constant dense<0.000000e+00> : vector<16x256xf32>
    %38 = tpu.matmul %36, %37, %cst_11 {dimension_numbers = #tpu.dot_dimension_numbers<[1], [0], [0], [1], [0, 0, 1, 1], [], []>} : vector<16x64xbf16>, vector<64x256xbf16>, vector<16x256xf32> -> vector<16x256xf32>
    %c0_12 = arith.constant 0 : index
    %c0_13 = arith.constant 0 : index
    %39 = vector.load %arg7[%c0_12, %c0_13] : memref<16x1xf32, #tpu.memory_space<vmem>>, vector<16x1xf32>
    %40 = vector.broadcast %39 : vector<16x1xf32> to vector<16x256xf32>
    %41 = arith.addf %38, %40 : vector<16x256xf32>
    %42 = vector.extract_strided_slice %41 {offsets = [0, 0], sizes = [5, 256], strides = [1, 1]} : vector<16x256xf32> to vector<5x256xf32>
    %cst_14 = arith.constant dense<0xFF800000> : vector<256xf32>
    %43 = vector.multi_reduction <maximumf>, %42, %cst_14 [0] : vector<5x256xf32> to vector<256xf32>
    %44 = vector.shape_cast %43 : vector<256xf32> to vector<1x256xf32>
    %45 = vector.broadcast %44 : vector<1x256xf32> to vector<5x256xf32>
    %46 = arith.subf %42, %45 : vector<5x256xf32>
    %47 = math.exp %46 : vector<5x256xf32>
    %cst_15 = arith.constant dense<0.000000e+00> : vector<256xf32>
    %48 = vector.multi_reduction <add>, %47, %cst_15 [0] : vector<5x256xf32> to vector<256xf32>
    %49 = vector.shape_cast %48 : vector<256xf32> to vector<1x256xf32>
    %50 = tpu.reciprocal %49 {approx = true} : vector<1x256xf32> -> vector<1x256xf32>
    %51 = arith.mulf %49, %50 : vector<1x256xf32>
    %cst_16 = arith.constant 2.000000e+00 : f32
    %52 = vector.broadcast %cst_16 : f32 to vector<1x256xf32>
    %53 = arith.subf %52, %51 : vector<1x256xf32>
    %54 = arith.mulf %50, %53 : vector<1x256xf32>
    %55 = vector.broadcast %54 : vector<1x256xf32> to vector<5x256xf32>
    %56 = arith.mulf %47, %55 : vector<5x256xf32>
    %c0_17 = arith.constant 0 : index
    %c0_18 = arith.constant 0 : index
    %57 = vector.load %arg8[%c0_17, %c0_18] : memref<5x256xf32, #tpu.memory_space<vmem>>, vector<5x256xf32>
    tpu.vector_store %arg8[%c0_17, %c0_18], %56 {strides = array<i32>} : memref<5x256xf32, #tpu.memory_space<vmem>>, vector<5x256xf32>,
    %58 = vector.extract_strided_slice %41 {offsets = [8, 0], sizes = [5, 256], strides = [1, 1]} : vector<16x256xf32> to vector<5x256xf32>
    %59 = math.exp %58 : vector<5x256xf32>
    %c0_19 = arith.constant 0 : index
    %c0_20 = arith.constant 0 : index
    %60 = vector.load %arg9[%c0_19, %c0_20] : memref<5x256xf32, #tpu.memory_space<vmem>>, vector<5x256xf32>
    tpu.vector_store %arg9[%c0_19, %c0_20], %59 {strides = array<i32>} : memref<5x256xf32, #tpu.memory_space<vmem>>, vector<5x256xf32>,
    return
  }
  func.func @transform_0(%arg0: i32) -> (i32, i32) {
    %c0_i32 = arith.constant 0 : i32
    %c0_i32_0 = arith.constant 0 : i32
    return %c0_i32, %arg0 : i32, i32
  }
  func.func @transform_1(%arg0: i32) -> (i32, i32) {
    %c0_i32 = arith.constant 0 : i32
    %c0_i32_0 = arith.constant 0 : i32
    %c0_i32_1 = arith.constant 0 : i32
    return %c0_i32, %c0_i32_0 : i32, i32
  }
  func.func @transform_2(%arg0: i32) -> (i32, i32) {
    %c0_i32 = arith.constant 0 : i32
    %c0_i32_0 = arith.constant 0 : i32
    %c0_i32_1 = arith.constant 0 : i32
    return %c0_i32, %c0_i32_0 : i32, i32
  }
  func.func @transform_3(%arg0: i32) -> (i32, i32) {
    %c0_i32 = arith.constant 0 : i32
    %c0_i32_0 = arith.constant 0 : i32
    %c0_i32_1 = arith.constant 0 : i32
    return %c0_i32, %c0_i32_0 : i32, i32
  }
  func.func @transform_4(%arg0: i32) -> (i32, i32) {
    %c0_i32 = arith.constant 0 : i32
    %c0_i32_0 = arith.constant 0 : i32
    %c0_i32_1 = arith.constant 0 : i32
    return %c0_i32, %c0_i32_0 : i32, i32
  }
  func.func @transform_5(%arg0: i32) -> (i32, i32) {
    %c0_i32 = arith.constant 0 : i32
    %c0_i32_0 = arith.constant 0 : i32
    %c0_i32_1 = arith.constant 0 : i32
    return %c0_i32, %c0_i32_0 : i32, i32
  }
  func.func @transform_6(%arg0: i32) -> (i32, i32) {
    %c0_i32 = arith.constant 0 : i32
    %c0_i32_0 = arith.constant 0 : i32
    %c0_i32_1 = arith.constant 0 : i32
    return %c0_i32, %c0_i32_0 : i32, i32
  }
  func.func @transform_7(%arg0: i32) -> (i32, i32) {
    %c0_i32 = arith.constant 0 : i32
    %c0_i32_0 = arith.constant 0 : i32
    return %c0_i32, %arg0 : i32, i32
  }
  func.func @transform_8(%arg0: i32) -> (i32, i32) {
    %c0_i32 = arith.constant 0 : i32
    %c0_i32_0 = arith.constant 0 : i32
    return %c0_i32, %arg0 : i32, i32
  }
}

</mosaic_0001>

<llo_original>
// kernel: tpu_custom_call.1
$region0: #{tpu_custom_call.1}
  #allocation0 [shape = 'u32[]', space=smem, size = 0x4, offset = 0x4, fixed_abs, tag = 'smem constant byte address 0x4 - core index']
  #allocation1 [shape = 'u32[72,128]{1,0:T(1,128)}', space=vmem, size = 0x9000, scoped, tag = 'internal scratch']
  %s0 = inlined_call_operand.vmem [shape: f32[4,512], index: 0, kind: input, shape index: {}]
  %s1 = inlined_call_operand.vmem [shape: f32[64,4], index: 1, kind: input, shape index: {}]
  %s2 = inlined_call_operand.vmem [shape: f32[64,1], index: 2, kind: input, shape index: {}]
  %s3 = inlined_call_operand.vmem [shape: bf16[64,64], index: 3, kind: input, shape index: {}]
  %s4 = inlined_call_operand.vmem [shape: f32[64,1], index: 4, kind: input, shape index: {}]
  %s5 = inlined_call_operand.vmem [shape: bf16[16,64], index: 5, kind: input, shape index: {}]
  %s6 = inlined_call_operand.vmem [shape: f32[16,1], index: 6, kind: input, shape index: {}]
  %s7 = inlined_call_operand.hbm [shape: f32[5,512], index: 7, kind: output, shape index: {0}]
  %s8 = inlined_call_operand.hbm [shape: f32[5,512], index: 8, kind: output, shape index: {1}]
  %9 = xla_tuple %s7, %s8
  %s10 = sld [smem:[#allocation0]]
  $region69: #{tpu_custom_call.1} parent=0
    _
  %s12 = ssub.s32 1, %s10
  %s13 = scalar_select 0, %s12, %s10
  $region1: #{tpu_custom_call.1} parent=0
    #allocation2 [shape = 'u8[16384]{0}', space=vmem, size = 0x4000, scoped, tag = 'output window, operand 0']
    #allocation3 [shape = 's32[2]{0}', space=sflag, size = 0x8, scoped, tag = 'scoped memory for tpu_custom_call.1']
    #allocation4 [shape = 'u8[16384]{0}', space=vmem, size = 0x4000, scoped, tag = 'output window, operand 1']
    #allocation5 [shape = 's32[2]{0}', space=sflag, size = 0x8, scoped, tag = 'scoped memory for tpu_custom_call.1']
    %14 = vsyncpa [#allocation3], 0
    %s15 = scalar_lea.sflag [#allocation3], 1
    %16 = vsyncpa %s15, 0
    %17 = vsyncpa [#allocation5], 0
    %s18 = scalar_lea.sflag [#allocation5], 1
    %19 = vsyncpa %s18, 0
    loop: start=0, step=1, limit=4
    $region2: #{tpu_custom_call.1} parent=1 // loop_pre_header
      _
    $region3: #{tpu_custom_call.1} parent=1 // loop_header
      %s21 = sphi 0, %s25
      %p22 = scmp.ge.s32.totalorder %s21, 4
      %s31 = sphi 0, %s33
      %s34 = sphi 0, %s31
      %s35 = sphi 0, %s34
      %s51 = sphi 0, %s35
      %s55 = sphi 0, %s55
      %s57 = sphi 0, %s55
      %s58 = sphi 0, %s57
      %s72 = sphi 0, %s58
      %s76 = sphi 0, %s76
      %s78 = sphi 0, %s76
      %s79 = sphi 0, %s78
      %s93 = sphi 0, %s79
      %s97 = sphi 0, %s97
      %s99 = sphi 0, %s97
      %s100 = sphi 0, %s99
      %s114 = sphi 0, %s100
      %s118 = sphi 0, %s118
      %s120 = sphi 0, %s118
      %s121 = sphi 0, %s120
      %s135 = sphi 0, %s121
      %s139 = sphi 0, %s139
      %s141 = sphi 0, %s139
      %s142 = sphi 0, %s141
      %s156 = sphi 0, %s142
      %s160 = sphi 0, %s160
      %s162 = sphi 0, %s160
      %s163 = sphi 0, %s162
      %s177 = sphi 0, %s163
      %s183 = sphi 0, %s185
      %s186 = sphi 0, %s183
      %s187 = sphi 0, %s186
      %s203 = sphi 0, %s187
      %s209 = sphi 0, %s211
      %s212 = sphi 0, %s209
      %s213 = sphi 0, %s212
      %s229 = sphi 0, %s213
    $region4: #{tpu_custom_call.1} parent=1 // loop_header_branch
      %24 = sbr.rel (%p22) target = $region8
    $region5: #{tpu_custom_call.1} parent=1 // loop_body
      %s26 = ssub.s32 %s21, 1
      %s27 = ssub.s32 %s21, 2
      %s28 = sadd.s32 %s21, 1
      %s29 = ssub.s32 %s21, %s28
      %p30 = scmp.eq.s32.totalorder %s29, 0
      %s32 = sadd.s32 %s31, 1
      %s33 = scalar_select %p30, %s31, %s32
      %p36 = pneg %p30
      %p37 = scmp.eq.s32.totalorder %s21, 1
      %p38 = por %p36, %p37
      %p39 = scmp.ne.s32.totalorder %s31, %s34
      %p40 = scmp.eq.s32.totalorder %s21, 0
      %p41 = por %p39, %p40
      %p42 = scmp.ne.s32.totalorder %s31, %s34
      %p43 = scmp.eq.s32.totalorder %s26, 1
      %p44 = por %p42, %p43
      %p45 = scmp.ne.s32.totalorder %s34, %s35
      %p46 = scmp.eq.s32.totalorder %s26, 0
      %p47 = por %p45, %p46
      %p48 = scmp.ne.s32.totalorder %s34, %s35
      %p49 = scmp.eq.s32.totalorder %s27, 1
      %p50 = por %p48, %p49
      %p52 = scmp.ne.s32.totalorder %s35, %s51
      %p53 = scmp.eq.s32.totalorder %s27, 0
      %p54 = por %p52, %p53
      %s56 = sadd.s32 %s55, 1
      %p59 = scmp.eq.s32.totalorder %s21, 1
      %p60 = scmp.ne.s32.totalorder %s55, %s57
      %p61 = scmp.eq.s32.totalorder %s21, 0
      %p62 = por %p60, %p61
      %p63 = scmp.ne.s32.totalorder %s55, %s57
      %p64 = scmp.eq.s32.totalorder %s26, 1
      %p65 = por %p63, %p64
      %p66 = scmp.ne.s32.totalorder %s57, %s58
      %p67 = scmp.eq.s32.totalorder %s26, 0
      %p68 = por %p66, %p67
      %p69 = scmp.ne.s32.totalorder %s57, %s58
      %p70 = scmp.eq.s32.totalorder %s27, 1
      %p71 = por %p69, %p70
      %p73 = scmp.ne.s32.totalorder %s58, %s72
      %p74 = scmp.eq.s32.totalorder %s27, 0
      %p75 = por %p73, %p74
      %s77 = sadd.s32 %s76, 1
      %p80 = scmp.eq.s32.totalorder %s21, 1
      %p81 = scmp.ne.s32.totalorder %s76, %s78
      %p82 = scmp.eq.s32.totalorder %s21, 0
      %p83 = por %p81, %p82
      %p84 = scmp.ne.s32.totalorder %s76, %s78
      %p85 = scmp.eq.s32.totalorder %s26, 1
      %p86 = por %p84, %p85
      %p87 = scmp.ne.s32.totalorder %s78, %s79
      %p88 = scmp.eq.s32.totalorder %s26, 0
      %p89 = por %p87, %p88
      %p90 = scmp.ne.s32.totalorder %s78, %s79
      %p91 = scmp.eq.s32.totalorder %s27, 1
      %p92 = por %p90, %p91
      %p94 = scmp.ne.s32.totalorder %s79, %s93
      %p95 = scmp.eq.s32.totalorder %s27, 0
      %p96 = por %p94, %p95
      %s98 = sadd.s32 %s97, 1
      %p101 = scmp.eq.s32.totalorder %s21, 1
      %p102 = scmp.ne.s32.totalorder %s97, %s99
      %p103 = scmp.eq.s32.totalorder %s21, 0
      %p104 = por %p102, %p103
      %p105 = scmp.ne.s32.totalorder %s97, %s99
      %p106 = scmp.eq.s32.totalorder %s26, 1
      %p107 = por %p105, %p106
      %p108 = scmp.ne.s32.totalorder %s99, %s100
      %p109 = scmp.eq.s32.totalorder %s26, 0
      %p110 = por %p108, %p109
      %p111 = scmp.ne.s32.totalorder %s99, %s100
      %p112 = scmp.eq.s32.totalorder %s27, 1
      %p113 = por %p111, %p112
      %p115 = scmp.ne.s32.totalorder %s100, %s114
      %p116 = scmp.eq.s32.totalorder %s27, 0
      %p117 = por %p115, %p116
      %s119 = sadd.s32 %s118, 1
      %p122 = scmp.eq.s32.totalorder %s21, 1
      %p123 = scmp.ne.s32.totalorder %s118, %s120
      %p124 = scmp.eq.s32.totalorder %s21, 0
      %p125 = por %p123, %p124
      %p126 = scmp.ne.s32.totalorder %s118, %s120
      %p127 = scmp.eq.s32.totalorder %s26, 1
      %p128 = por %p126, %p127
      %p129 = scmp.ne.s32.totalorder %s120, %s121
      %p130 = scmp.eq.s32.totalorder %s26, 0
      %p131 = por %p129, %p130
      %p132 = scmp.ne.s32.totalorder %s120, %s121
      %p133 = scmp.eq.s32.totalorder %s27, 1
      %p134 = por %p132, %p133
      %p136 = scmp.ne.s32.totalorder %s121, %s135
      %p137 = scmp.eq.s32.totalorder %s27, 0
      %p138 = por %p136, %p137
      %s140 = sadd.s32 %s139, 1
      %p143 = scmp.eq.s32.totalorder %s21, 1
      %p144 = scmp.ne.s32.totalorder %s139, %s141
      %p145 = scmp.eq.s32.totalorder %s21, 0
      %p146 = por %p144, %p145
      %p147 = scmp.ne.s32.totalorder %s139, %s141
      %p148 = scmp.eq.s32.totalorder %s26, 1
      %p149 = por %p147, %p148
      %p150 = scmp.ne.s32.totalorder %s141, %s142
      %p151 = scmp.eq.s32.totalorder %s26, 0
      %p152 = por %p150, %p151
      %p153 = scmp.ne.s32.totalorder %s141, %s142
      %p154 = scmp.eq.s32.totalorder %s27, 1
      %p155 = por %p153, %p154
      %p157 = scmp.ne.s32.totalorder %s142, %s156
      %p158 = scmp.eq.s32.totalorder %s27, 0
      %p159 = por %p157, %p158
      %s161 = sadd.s32 %s160, 1
      %p164 = scmp.eq.s32.totalorder %s21, 1
      %p165 = scmp.ne.s32.totalorder %s160, %s162
      %p166 = scmp.eq.s32.totalorder %s21, 0
      %p167 = por %p165, %p166
      %p168 = scmp.ne.s32.totalorder %s160, %s162
      %p169 = scmp.eq.s32.totalorder %s26, 1
      %p170 = por %p168, %p169
      %p171 = scmp.ne.s32.totalorder %s162, %s163
      %p172 = scmp.eq.s32.totalorder %s26, 0
      %p173 = por %p171, %p172
      %p174 = scmp.ne.s32.totalorder %s162, %s163
      %p175 = scmp.eq.s32.totalorder %s27, 1
      %p176 = por %p174, %p175
      %p178 = scmp.ne.s32.totalorder %s163, %s177
      %p179 = scmp.eq.s32.totalorder %s27, 0
      %p180 = por %p178, %p179
      %s181 = ssub.s32 %s21, %s28
      %p182 = scmp.eq.s32.totalorder %s181, 0
      %s184 = sadd.s32 %s183, 1
      %s185 = scalar_select %p182, %s183, %s184
      %p188 = pneg %p182
      %p189 = scmp.eq.s32.totalorder %s21, 1
      %p190 = por %p188, %p189
      %p191 = scmp.ne.s32.totalorder %s183, %s186
      %p192 = scmp.eq.s32.totalorder %s21, 0
      %p193 = por %p191, %p192
      %p194 = scmp.ne.s32.totalorder %s183, %s186
      %p195 = scmp.eq.s32.totalorder %s26, 1
      %p196 = por %p194, %p195
      %p197 = scmp.ne.s32.totalorder %s186, %s187
      %p198 = scmp.eq.s32.totalorder %s26, 0
      %p199 = por %p197, %p198
      %p200 = scmp.ne.s32.totalorder %s186, %s187
      %p201 = scmp.eq.s32.totalorder %s27, 1
      %p202 = por %p200, %p201
      %p204 = scmp.ne.s32.totalorder %s187, %s203
      %p205 = scmp.eq.s32.totalorder %s27, 0
      %p206 = por %p204, %p205
      %s207 = ssub.s32 %s21, %s28
      %p208 = scmp.eq.s32.totalorder %s207, 0
      %s210 = sadd.s32 %s209, 1
      %s211 = scalar_select %p208, %s209, %s210
      %p214 = pneg %p208
      %p215 = scmp.eq.s32.totalorder %s21, 1
      %p216 = por %p214, %p215
      %p217 = scmp.ne.s32.totalorder %s209, %s212
      %p218 = scmp.eq.s32.totalorder %s21, 0
      %p219 = por %p217, %p218
      %p220 = scmp.ne.s32.totalorder %s209, %s212
      %p221 = scmp.eq.s32.totalorder %s26, 1
      %p222 = por %p220, %p221
      %p223 = scmp.ne.s32.totalorder %s212, %s213
      %p224 = scmp.eq.s32.totalorder %s26, 0
      %p225 = por %p223, %p224
      %p226 = scmp.ne.s32.totalorder %s212, %s213
      %p227 = scmp.eq.s32.totalorder %s27, 1
      %p228 = por %p226, %p227
      %p230 = scmp.ne.s32.totalorder %s213, %s229
      %p231 = scmp.eq.s32.totalorder %s27, 0
      %p232 = por %p230, %p231
      %p233 = scmp.le.s32.totalorder 1, %s21
      %p234 = scmp.lt.s32.totalorder %s21, 3
      %p235 = pnand %p233, %p234
      %p236 = pneg %p235
      // Predicated region
      $region9: #{tpu_custom_call.1} parent=5 // pred_check
        _
      $region10: #{tpu_custom_call.1} parent=5 // pred_check_branch
        %238 = sbr.rel (%p235) target = $region12
      $region11: #{tpu_custom_call.1} parent=5 // pred_region
        %s239 = ssub.s32 %s21, 1
        // Predicated region
        $region13: #{tpu_custom_call.1} parent=11 // pred_check
          %p240 = pneg %p68
        $region14: #{tpu_custom_call.1} parent=11 // pred_check_branch
          %242 = sbr.rel (%p240) target = $region16
        $region15: #{tpu_custom_call.1} parent=11 // pred_region
          _
        $region16: #{tpu_custom_call.1} parent=11 // pred_fallthru
          _
        // Predicated region
        $region17: #{tpu_custom_call.1} parent=11 // pred_check
          %p243 = pneg %p89
        $region18: #{tpu_custom_call.1} parent=11 // pred_check_branch
          %245 = sbr.rel (%p243) target = $region20
        $region19: #{tpu_custom_call.1} parent=11 // pred_region
          _
        $region20: #{tpu_custom_call.1} parent=11 // pred_fallthru
          _
        // Predicated region
        $region21: #{tpu_custom_call.1} parent=11 // pred_check
          %p246 = pneg %p110
        $region22: #{tpu_custom_call.1} parent=11 // pred_check_branch
          %248 = sbr.rel (%p246) target = $region24
        $region23: #{tpu_custom_call.1} parent=11 // pred_region
          _
        $region24: #{tpu_custom_call.1} parent=11 // pred_fallthru
          _
        // Predicated region
        $region25: #{tpu_custom_call.1} parent=11 // pred_check
          %p249 = pneg %p131
        $region26: #{tpu_custom_call.1} parent=11 // pred_check_branch
          %251 = sbr.rel (%p249) target = $region28
        $region27: #{tpu_custom_call.1} parent=11 // pred_region
          _
        $region28: #{tpu_custom_call.1} parent=11 // pred_fallthru
          _
        // Predicated region
        $region29: #{tpu_custom_call.1} parent=11 // pred_check
          %p252 = pneg %p152
        $region30: #{tpu_custom_call.1} parent=11 // pred_check_branch
          %254 = sbr.rel (%p252) target = $region32
        $region31: #{tpu_custom_call.1} parent=11 // pred_region
          _
        $region32: #{tpu_custom_call.1} parent=11 // pred_fallthru
          _
        // Predicated region
        $region33: #{tpu_custom_call.1} parent=11 // pred_check
          %p255 = pneg %p173
        $region34: #{tpu_custom_call.1} parent=11 // pred_check_branch
          %257 = sbr.rel (%p255) target = $region36
        $region35: #{tpu_custom_call.1} parent=11 // pred_region
          _
        $region36: #{tpu_custom_call.1} parent=11 // pred_fallthru
          _
      $region12: #{tpu_custom_call.1} parent=5 // pred_fallthru
        _
      %p258 = scmp.lt.s32.totalorder %s21, 2
      // Predicated region
      $region37: #{tpu_custom_call.1} parent=5 // pred_check
        %p259 = pneg %p258
      $region38: #{tpu_custom_call.1} parent=5 // pred_check_branch
        %261 = sbr.rel (%p259) target = $region40
      $region39: #{tpu_custom_call.1} parent=5 // pred_region
        // Predicated region
        $region41: #{tpu_custom_call.1} parent=39 // pred_check
          %p262 = pneg %p41
        $region42: #{tpu_custom_call.1} parent=39 // pred_check_branch
          %264 = sbr.rel (%p262) target = $region44
        $region43: #{tpu_custom_call.1} parent=39 // pred_region
          %s265 = smul.u32 2, %s21
          %p266 = scmp.lt.s32.totalorder %s265, 3
          %s267 = scalar_select %p266, %s265, 3
          %s268 = smul.addr %s267, 4
          %s269 = scalar_lea.vmem %s0, %s268
          %s270 = smul.u32 2, %s21
        $region44: #{tpu_custom_call.1} parent=39 // pred_fallthru
          _
      $region40: #{tpu_custom_call.1} parent=5 // pred_fallthru
        _
      %p271 = scmp.le.s32.totalorder 1, %s21
      %p272 = scmp.lt.s32.totalorder %s21, 3
      %p273 = pnand %p271, %p272
      %p274 = pneg %p273
      // Predicated region
      $region45: #{tpu_custom_call.1} parent=5 // pred_check
        _
      $region46: #{tpu_custom_call.1} parent=5 // pred_check_branch
        %276 = sbr.rel (%p273) target = $region48
      $region47: #{tpu_custom_call.1} parent=5 // pred_region
        %s277 = ssub.s32 %s21, 1
        %s278 = smul.u32 2, %s26
        %p279 = scmp.lt.s32.totalorder %s278, 3
        %s280 = scalar_select %p279, %s278, 3
        %s281 = smul.addr %s280, 4
        %s282 = scalar_lea.vmem %s0, %s281
        %p283 = pneg %p47
        %p284 = pneg %p44
        %p285 = pneg %p68
        %p286 = pneg %p65
        %p287 = pneg %p89
        %p288 = pneg %p86
        %p289 = pneg %p110
        %p290 = pneg %p107
        %p291 = pneg %p131
        %p292 = pneg %p128
        %p293 = pneg %p152
        %p294 = pneg %p149
        %p295 = pneg %p173
        %p296 = pneg %p170
        %p297 = pneg %p199
        %p298 = pneg %p196
        %s299 = sand.u32 %s186, 1
        %s300 = scalar_lea.sflag [#allocation3], %s299
        %s301 = sand.u32 %s186, 1
        %s302 = smul.addr %s301, 16
        %s303 = scalar_lea.vmem [#allocation2], %s302
        %p304 = pneg %p225
        %p305 = pneg %p222
        %s306 = sand.u32 %s212, 1
        %s307 = scalar_lea.sflag [#allocation5], %s306
        %s308 = sand.u32 %s212, 1
        %s309 = smul.addr %s308, 16
        %s310 = scalar_lea.vmem [#allocation4], %s309
        %s311 = smul.u32 2, %s26
        %p312 = scmp.lt.s32.totalorder %s311, 3
        %s313 = scalar_select %p312, %s311, 3
        %s314 = smul.addr %s313, 4
        %s315 = scalar_lea.vmem %s0, %s314
        %s316 = smul.u32 2, %s26
        %s317 = smul.u32 2, %s26
        %s318 = smul.u32 2, %s26
        %v320 = vld [vmem:[%s315] sm:$0xff]
        %v321 = vld [vmem:[%s1] sm:$0xff]
        %v322 = vld [vmem:[%s1 + $0x8] sm:$0xff]
        %v323 = vld [vmem:[%s1 + $0x10] sm:$0xff]
        %v324 = vld [vmem:[%s1 + $0x18] sm:$0xff]
        %v325 = vld [vmem:[%s1 + $0x20] sm:$0xff]
        %v326 = vld [vmem:[%s1 + $0x28] sm:$0xff]
        %v327 = vld [vmem:[%s1 + $0x30] sm:$0xff]
        %v328 = vld [vmem:[%s1 + $0x38] sm:$0xff]
        %v329 = vld [vmem:[%s2] sm:$0xff]
        %v330 = vld [vmem:[%s2 + $0x8] sm:$0xff]
        %v331 = vld [vmem:[%s2 + $0x10] sm:$0xff]
        %v332 = vld [vmem:[%s2 + $0x18] sm:$0xff]
        %v333 = vld [vmem:[%s2 + $0x20] sm:$0xff]
        %v334 = vld [vmem:[%s2 + $0x28] sm:$0xff]
        %v335 = vld [vmem:[%s2 + $0x30] sm:$0xff]
        %v336 = vld [vmem:[%s2 + $0x38] sm:$0xff]
        %338 = vset.pattern.permute.xlu0 0
        %339 = vperm.xlu0 %338, %v321
        %v340 = vpop.permute.xlu0 %339
        %343 = vset.pattern.permute.xlu0 0
        %344 = vperm.xlu0 %343, %v322
        %v345 = vpop.permute.xlu0 %344
        %348 = vset.pattern.permute.xlu0 0
        %349 = vperm.xlu0 %348, %v323
        %v350 = vpop.permute.xlu0 %349
        %353 = vset.pattern.permute.xlu0 0
        %354 = vperm.xlu0 %353, %v324
        %v355 = vpop.permute.xlu0 %354
        %358 = vset.pattern.permute.xlu0 0
        %359 = vperm.xlu0 %358, %v325
        %v360 = vpop.permute.xlu0 %359
        %363 = vset.pattern.permute.xlu0 0
        %364 = vperm.xlu0 %363, %v326
        %v365 = vpop.permute.xlu0 %364
        %368 = vset.pattern.permute.xlu0 0
        %369 = vperm.xlu0 %368, %v327
        %v370 = vpop.permute.xlu0 %369
        %373 = vset.pattern.permute.xlu0 0
        %374 = vperm.xlu0 %373, %v328
        %v375 = vpop.permute.xlu0 %374
        %v378 = vperm.slane %v320, 0
        %v379 = vperm.slane %v320, 4
        %v382 = vperm.slane %v378, 0
        %v383 = vperm.slane %v379, 0
        %v384 = vmul.f32 %v340, %v382
        %v385 = vmul.f32 %v340, %v383
        %v386 = vmul.f32 %v345, %v382
        %v387 = vmul.f32 %v345, %v383
        %v388 = vmul.f32 %v350, %v382
        %v389 = vmul.f32 %v350, %v383
        %v390 = vmul.f32 %v355, %v382
        %v391 = vmul.f32 %v355, %v383
        %v392 = vmul.f32 %v360, %v382
        %v393 = vmul.f32 %v360, %v383
        %v394 = vmul.f32 %v365, %v382
        %v395 = vmul.f32 %v365, %v383
        %v396 = vmul.f32 %v370, %v382
        %v397 = vmul.f32 %v370, %v383
        %v398 = vmul.f32 %v375, %v382
        %v399 = vmul.f32 %v375, %v383
        %401 = vset.pattern.permute.xlu0 0
        %402 = vperm.xlu0 %401, %v329
        %v403 = vpop.permute.xlu0 %402
        %406 = vset.pattern.permute.xlu0 0
        %407 = vperm.xlu0 %406, %v330
        %v408 = vpop.permute.xlu0 %407
        %411 = vset.pattern.permute.xlu0 0
        %412 = vperm.xlu0 %411, %v331
        %v413 = vpop.permute.xlu0 %412
        %416 = vset.pattern.permute.xlu0 0
        %417 = vperm.xlu0 %416, %v332
        %v418 = vpop.permute.xlu0 %417
        %421 = vset.pattern.permute.xlu0 0
        %422 = vperm.xlu0 %421, %v333
        %v423 = vpop.permute.xlu0 %422
        %426 = vset.pattern.permute.xlu0 0
        %427 = vperm.xlu0 %426, %v334
        %v428 = vpop.permute.xlu0 %427
        %431 = vset.pattern.permute.xlu0 0
        %432 = vperm.xlu0 %431, %v335
        %v433 = vpop.permute.xlu0 %432
        %436 = vset.pattern.permute.xlu0 0
        %437 = vperm.xlu0 %436, %v336
        %v438 = vpop.permute.xlu0 %437
        %v440 = vadd.f32 %v403, %v384
        %v441 = vadd.f32 %v403, %v385
        %v442 = vadd.f32 %v408, %v386
        %v443 = vadd.f32 %v408, %v387
        %v444 = vadd.f32 %v413, %v388
        %v445 = vadd.f32 %v413, %v389
        %v446 = vadd.f32 %v418, %v390
        %v447 = vadd.f32 %v418, %v391
        %v448 = vadd.f32 %v423, %v392
        %v449 = vadd.f32 %v423, %v393
        %v450 = vadd.f32 %v428, %v394
        %v451 = vadd.f32 %v428, %v395
        %v452 = vadd.f32 %v433, %v396
        %v453 = vadd.f32 %v433, %v397
        %v454 = vadd.f32 %v438, %v398
        %v455 = vadd.f32 %v438, %v399
        %456 = vset.pattern.permute.xlu0 1
        %457 = vperm.xlu0 %456, %v321
        %v458 = vpop.permute.xlu0 %457
        %460 = vset.pattern.permute.xlu0 1
        %461 = vperm.xlu0 %460, %v322
        %v462 = vpop.permute.xlu0 %461
        %464 = vset.pattern.permute.xlu0 1
        %465 = vperm.xlu0 %464, %v323
        %v466 = vpop.permute.xlu0 %465
        %468 = vset.pattern.permute.xlu0 1
        %469 = vperm.xlu0 %468, %v324
        %v470 = vpop.permute.xlu0 %469
        %472 = vset.pattern.permute.xlu0 1
        %473 = vperm.xlu0 %472, %v325
        %v474 = vpop.permute.xlu0 %473
        %476 = vset.pattern.permute.xlu0 1
        %477 = vperm.xlu0 %476, %v326
        %v478 = vpop.permute.xlu0 %477
        %480 = vset.pattern.permute.xlu0 1
        %481 = vperm.xlu0 %480, %v327
        %v482 = vpop.permute.xlu0 %481
        %484 = vset.pattern.permute.xlu0 1
        %485 = vperm.xlu0 %484, %v328
        %v486 = vpop.permute.xlu0 %485
        %v488 = vperm.slane %v320, 1
        %v489 = vperm.slane %v320, 5
        %v492 = vperm.slane %v488, 1
        %v493 = vperm.slane %v489, 1
        %v494 = vmul.f32 %v458, %v492
        %v495 = vmul.f32 %v458, %v493
        %v496 = vmul.f32 %v462, %v492
        %v497 = vmul.f32 %v462, %v493
        %v498 = vmul.f32 %v466, %v492
        %v499 = vmul.f32 %v466, %v493
        %v500 = vmul.f32 %v470, %v492
        %v501 = vmul.f32 %v470, %v493
        %v502 = vmul.f32 %v474, %v492
        %v503 = vmul.f32 %v474, %v493
        %v504 = vmul.f32 %v478, %v492
        %v505 = vmul.f32 %v478, %v493
        %v506 = vmul.f32 %v482, %v492
        %v507 = vmul.f32 %v482, %v493
        %v508 = vmul.f32 %v486, %v492
        %v509 = vmul.f32 %v486, %v493
        %v510 = vadd.f32 %v440, %v494
        %v511 = vadd.f32 %v441, %v495
        %v512 = vadd.f32 %v442, %v496
        %v513 = vadd.f32 %v443, %v497
        %v514 = vadd.f32 %v444, %v498
        %v515 = vadd.f32 %v445, %v499
        %v516 = vadd.f32 %v446, %v500
        %v517 = vadd.f32 %v447, %v501
        %v518 = vadd.f32 %v448, %v502
        %v519 = vadd.f32 %v449, %v503
        %v520 = vadd.f32 %v450, %v504
        %v521 = vadd.f32 %v451, %v505
        %v522 = vadd.f32 %v452, %v506
        %v523 = vadd.f32 %v453, %v507
        %v524 = vadd.f32 %v454, %v508
        %v525 = vadd.f32 %v455, %v509
        %526 = vset.pattern.permute.xlu0 2
        %527 = vperm.xlu0 %526, %v321
        %v528 = vpop.permute.xlu0 %527
        %530 = vset.pattern.permute.xlu0 2
        %531 = vperm.xlu0 %530, %v322
        %v532 = vpop.permute.xlu0 %531
        %534 = vset.pattern.permute.xlu0 2
        %535 = vperm.xlu0 %534, %v323
        %v536 = vpop.permute.xlu0 %535
        %538 = vset.pattern.permute.xlu0 2
        %539 = vperm.xlu0 %538, %v324
        %v540 = vpop.permute.xlu0 %539
        %542 = vset.pattern.permute.xlu0 2
        %543 = vperm.xlu0 %542, %v325
        %v544 = vpop.permute.xlu0 %543
        %546 = vset.pattern.permute.xlu0 2
        %547 = vperm.xlu0 %546, %v326
        %v548 = vpop.permute.xlu0 %547
        %550 = vset.pattern.permute.xlu0 2
        %551 = vperm.xlu0 %550, %v327
        %v552 = vpop.permute.xlu0 %551
        %554 = vset.pattern.permute.xlu0 2
        %555 = vperm.xlu0 %554, %v328
        %v556 = vpop.permute.xlu0 %555
        %v558 = vperm.slane %v320, 2
        %v559 = vperm.slane %v320, 6
        %v562 = vperm.slane %v558, 2
        %v563 = vperm.slane %v559, 2
        %v564 = vmul.f32 %v528, %v562
        %v565 = vmul.f32 %v528, %v563
        %v566 = vmul.f32 %v532, %v562
        %v567 = vmul.f32 %v532, %v563
        %v568 = vmul.f32 %v536, %v562
        %v569 = vmul.f32 %v536, %v563
        %v570 = vmul.f32 %v540, %v562
        %v571 = vmul.f32 %v540, %v563
        %v572 = vmul.f32 %v544, %v562
        %v573 = vmul.f32 %v544, %v563
        %v574 = vmul.f32 %v548, %v562
        %v575 = vmul.f32 %v548, %v563
        %v576 = vmul.f32 %v552, %v562
        %v577 = vmul.f32 %v552, %v563
        %v578 = vmul.f32 %v556, %v562
        %v579 = vmul.f32 %v556, %v563
        %v580 = vadd.f32 %v510, %v564
        %v581 = vadd.f32 %v511, %v565
        %v582 = vadd.f32 %v512, %v566
        %v583 = vadd.f32 %v513, %v567
        %v584 = vadd.f32 %v514, %v568
        %v585 = vadd.f32 %v515, %v569
        %v586 = vadd.f32 %v516, %v570
        %v587 = vadd.f32 %v517, %v571
        %v588 = vadd.f32 %v518, %v572
        %v589 = vadd.f32 %v519, %v573
        %v590 = vadd.f32 %v520, %v574
        %v591 = vadd.f32 %v521, %v575
        %v592 = vadd.f32 %v522, %v576
        %v593 = vadd.f32 %v523, %v577
        %v594 = vadd.f32 %v524, %v578
        %v595 = vadd.f32 %v525, %v579
        %596 = vset.pattern.permute.xlu0 3
        %597 = vperm.xlu0 %596, %v321
        %v598 = vpop.permute.xlu0 %597
        %600 = vset.pattern.permute.xlu0 3
        %601 = vperm.xlu0 %600, %v322
        %v602 = vpop.permute.xlu0 %601
        %604 = vset.pattern.permute.xlu0 3
        %605 = vperm.xlu0 %604, %v323
        %v606 = vpop.permute.xlu0 %605
        %608 = vset.pattern.permute.xlu0 3
        %609 = vperm.xlu0 %608, %v324
        %v610 = vpop.permute.xlu0 %609
        %612 = vset.pattern.permute.xlu0 3
        %613 = vperm.xlu0 %612, %v325
        %v614 = vpop.permute.xlu0 %613
        %616 = vset.pattern.permute.xlu0 3
        %617 = vperm.xlu0 %616, %v326
        %v618 = vpop.permute.xlu0 %617
        %620 = vset.pattern.permute.xlu0 3
        %621 = vperm.xlu0 %620, %v327
        %v622 = vpop.permute.xlu0 %621
        %624 = vset.pattern.permute.xlu0 3
        %625 = vperm.xlu0 %624, %v328
        %v626 = vpop.permute.xlu0 %625
        %v628 = vperm.slane %v320, 3
        %v629 = vperm.slane %v320, 7
        %v632 = vperm.slane %v628, 3
        %v633 = vperm.slane %v629, 3
        %v634 = vmul.f32 %v598, %v632
        %v635 = vmul.f32 %v598, %v633
        %v636 = vmul.f32 %v602, %v632
        %v637 = vmul.f32 %v602, %v633
        %v638 = vmul.f32 %v606, %v632
        %v639 = vmul.f32 %v606, %v633
        %v640 = vmul.f32 %v610, %v632
        %v641 = vmul.f32 %v610, %v633
        %v642 = vmul.f32 %v614, %v632
        %v643 = vmul.f32 %v614, %v633
        %v644 = vmul.f32 %v618, %v632
        %v645 = vmul.f32 %v618, %v633
        %v646 = vmul.f32 %v622, %v632
        %v647 = vmul.f32 %v622, %v633
        %v648 = vmul.f32 %v626, %v632
        %v649 = vmul.f32 %v626, %v633
        %v650 = vadd.f32 %v580, %v634
        %v651 = vadd.f32 %v581, %v635
        %v652 = vadd.f32 %v582, %v636
        %v653 = vadd.f32 %v583, %v637
        %v654 = vadd.f32 %v584, %v638
        %v655 = vadd.f32 %v585, %v639
        %v656 = vadd.f32 %v586, %v640
        %v657 = vadd.f32 %v587, %v641
        %v658 = vadd.f32 %v588, %v642
        %v659 = vadd.f32 %v589, %v643
        %v660 = vadd.f32 %v590, %v644
        %v661 = vadd.f32 %v591, %v645
        %v662 = vadd.f32 %v592, %v646
        %v663 = vadd.f32 %v593, %v647
        %v664 = vadd.f32 %v594, %v648
        %v665 = vadd.f32 %v595, %v649
        %v666 = vtanh.pop %v650
        %v667 = vtanh.pop %v651
        %v668 = vtanh.pop %v652
        %v669 = vtanh.pop %v653
        %v670 = vtanh.pop %v654
        %v671 = vtanh.pop %v655
        %v672 = vtanh.pop %v656
        %v673 = vtanh.pop %v657
        %v674 = vtanh.pop %v658
        %v675 = vtanh.pop %v659
        %v676 = vtanh.pop %v660
        %v677 = vtanh.pop %v661
        %v678 = vtanh.pop %v662
        %v679 = vtanh.pop %v663
        %v680 = vtanh.pop %v664
        %v681 = vtanh.pop %v665
        %v682 = vld [vmem:[%s3] sm:$0xf]
        %v683 = vld [vmem:[%s3 + $0x4] sm:$0xf]
        %v684 = vld [vmem:[%s3 + $0x8] sm:$0xf]
        %v685 = vld [vmem:[%s3 + $0xc] sm:$0xf]
        %v686 = vld [vmem:[%s3 + $0x10] sm:$0xf]
        %v687 = vld [vmem:[%s3 + $0x14] sm:$0xf]
        %v688 = vld [vmem:[%s3 + $0x18] sm:$0xf]
        %v689 = vld [vmem:[%s3 + $0x1c] sm:$0xf]
        %v690 = vpack.c.bf16 %v668, %v666
        %v691 = vpack.c.bf16 %v669, %v667
        %v692 = vpack.c.bf16 %v672, %v670
        %v693 = vpack.c.bf16 %v673, %v671
        %v694 = vpack.c.bf16 %v676, %v674
        %v695 = vpack.c.bf16 %v677, %v675
        %v696 = vpack.c.bf16 %v680, %v678
        %v697 = vpack.c.bf16 %v681, %v679
        %v698 = vld [vmem:[%s4] sm:$0xff]
        %v699 = vld [vmem:[%s4 + $0x8] sm:$0xff]
        %v700 = vld [vmem:[%s4 + $0x10] sm:$0xff]
        %v701 = vld [vmem:[%s4 + $0x18] sm:$0xff]
        %v702 = vld [vmem:[%s4 + $0x20] sm:$0xff]
        %v703 = vld [vmem:[%s4 + $0x28] sm:$0xff]
        %v704 = vld [vmem:[%s4 + $0x30] sm:$0xff]
        %v705 = vld [vmem:[%s4 + $0x38] sm:$0xff]
        %707 = vset.pattern.permute.xlu0 0
        %708 = vperm.xlu0 %707, %v698
        %v709 = vpop.permute.xlu0 %708
        %712 = vset.pattern.permute.xlu0 0
        %713 = vperm.xlu0 %712, %v699
        %v714 = vpop.permute.xlu0 %713
        %717 = vset.pattern.permute.xlu0 0
        %718 = vperm.xlu0 %717, %v700
        %v719 = vpop.permute.xlu0 %718
        %722 = vset.pattern.permute.xlu0 0
        %723 = vperm.xlu0 %722, %v701
        %v724 = vpop.permute.xlu0 %723
        %727 = vset.pattern.permute.xlu0 0
        %728 = vperm.xlu0 %727, %v702
        %v729 = vpop.permute.xlu0 %728
        %732 = vset.pattern.permute.xlu0 0
        %733 = vperm.xlu0 %732, %v703
        %v734 = vpop.permute.xlu0 %733
        %737 = vset.pattern.permute.xlu0 0
        %738 = vperm.xlu0 %737, %v704
        %v739 = vpop.permute.xlu0 %738
        %742 = vset.pattern.permute.xlu0 0
        %743 = vperm.xlu0 %742, %v705
        %v744 = vpop.permute.xlu0 %743
        %v754 = vunpack.c.l.b16 %v682
        %v755 = vunpack.c.l.b16 %v683
        %v756 = vunpack.c.l.b16 %v684
        %v757 = vunpack.c.l.b16 %v685
        %v758 = vunpack.c.l.b16 %v686
        %v759 = vunpack.c.l.b16 %v687
        %v760 = vunpack.c.l.b16 %v688
        %v761 = vunpack.c.l.b16 %v689
        %v762 = vpack.c.b16 %v755, %v754
        %v763 = vpack.c.b16 %v757, %v756
        %v764 = vpack.c.b16 %v759, %v758
        %v765 = vpack.c.b16 %v761, %v760
        %vm766 = vcmask 523264
        %v768 = vsel %vm766, %v762, 0
        %v771 = vsel %vm766, %v763, 0
        %v774 = vsel %vm766, %v764, 0
        %v777 = vsel %vm766, %v765, 0
        %779 = vmatpush.bf16.msra.mxu0 0
        %780 = vmatpush.bf16.msra.mxu0 0
        %781 = vmatpush.bf16.msra.mxu0 0
        %782 = vmatpush.bf16.msra.mxu0 0
        %783 = vmatpush.bf16.msra.mxu0 %v696
        %784 = vmatpush.bf16.msra.mxu0 %v694
        %785 = vmatpush.bf16.msra.mxu0 %v692
        %786 = vmatpush.bf16.msra.mxu0 %v690
        %787 = vmatmul.bf16.gmra.mxu0 %v768
        %v788 = vpop.f32.mrf.mxu0
        %v789 = vadd.f32 %v709, %v788
        %v790 = vpop.f32.mrf.mxu0
        %v791 = vadd.f32 %v714, %v790
        %792 = vmatmul.bf16.gmra.mxu0 %v771
        %v793 = vpop.f32.mrf.mxu0
        %v794 = vadd.f32 %v719, %v793
        %v795 = vpop.f32.mrf.mxu0
        %v796 = vadd.f32 %v724, %v795
        %797 = vmatmul.bf16.gmra.mxu0 %v774
        %v798 = vpop.f32.mrf.mxu0
        %v799 = vadd.f32 %v729, %v798
        %v800 = vpop.f32.mrf.mxu0
        %v801 = vadd.f32 %v734, %v800
        %802 = vmatmul.bf16.gmra.mxu0 %v777
        %v803 = vpop.f32.mrf.mxu0
        %v804 = vadd.f32 %v739, %v803
        %v805 = vpop.f32.mrf.mxu0
        %v806 = vadd.f32 %v744, %v805
        %807 = vdwg.mxu0
        %808 = vmatpush.bf16.msra.mxu0 0
        %809 = vmatpush.bf16.msra.mxu0 0
        %810 = vmatpush.bf16.msra.mxu0 0
        %811 = vmatpush.bf16.msra.mxu0 0
        %812 = vmatpush.bf16.msra.mxu0 %v697
        %813 = vmatpush.bf16.msra.mxu0 %v695
        %814 = vmatpush.bf16.msra.mxu0 %v693
        %815 = vmatpush.bf16.msra.mxu0 %v691
        %816 = vmatmul.bf16.gmra.mxu0 %v768
        %v817 = vpop.f32.mrf.mxu0
        %v818 = vadd.f32 %v709, %v817
        %v819 = vpop.f32.mrf.mxu0
        %v820 = vadd.f32 %v714, %v819
        %821 = vmatmul.bf16.gmra.mxu0 %v771
        %v822 = vpop.f32.mrf.mxu0
        %v823 = vadd.f32 %v719, %v822
        %v824 = vpop.f32.mrf.mxu0
        %v825 = vadd.f32 %v724, %v824
        %826 = vmatmul.bf16.gmra.mxu0 %v774
        %v827 = vpop.f32.mrf.mxu0
        %v828 = vadd.f32 %v729, %v827
        %v829 = vpop.f32.mrf.mxu0
        %v830 = vadd.f32 %v734, %v829
        %831 = vmatmul.bf16.gmra.mxu0 %v777
        %v832 = vpop.f32.mrf.mxu0
        %v833 = vadd.f32 %v739, %v832
        %v834 = vpop.f32.mrf.mxu0
        %v835 = vadd.f32 %v744, %v834
        %836 = vdwg.mxu0
        %v837 = vtanh.pop %v789
        %v838 = vtanh.pop %v818
        %v839 = vtanh.pop %v791
        %v840 = vtanh.pop %v820
        %v841 = vtanh.pop %v794
        %v842 = vtanh.pop %v823
        %v843 = vtanh.pop %v796
        %v844 = vtanh.pop %v825
        %v845 = vtanh.pop %v799
        %v846 = vtanh.pop %v828
        %v847 = vtanh.pop %v801
        %v848 = vtanh.pop %v830
        %v849 = vtanh.pop %v804
        %v850 = vtanh.pop %v833
        %v851 = vtanh.pop %v806
        %v852 = vtanh.pop %v835
        %v853 = vld [vmem:[%s5] sm:$0xf]
        %v854 = vld [vmem:[%s5 + $0x4] sm:$0xf]
        %v855 = vpack.c.bf16 %v839, %v837
        %v856 = vpack.c.bf16 %v840, %v838
        %v857 = vpack.c.bf16 %v843, %v841
        %v858 = vpack.c.bf16 %v844, %v842
        %v859 = vpack.c.bf16 %v847, %v845
        %v860 = vpack.c.bf16 %v848, %v846
        %v861 = vpack.c.bf16 %v851, %v849
        %v862 = vpack.c.bf16 %v852, %v850
        %v863 = vld [vmem:[%s6] sm:$0xff]
        %v864 = vld [vmem:[%s6 + $0x8] sm:$0xff]
        %866 = vset.pattern.permute.xlu0 0
        %867 = vperm.xlu0 %866, %v863
        %v868 = vpop.permute.xlu0 %867
        %871 = vset.pattern.permute.xlu0 0
        %872 = vperm.xlu0 %871, %v864
        %v873 = vpop.permute.xlu0 %872
        %v877 = vunpack.c.l.b16 %v853
        %v878 = vunpack.c.l.b16 %v854
        %v879 = vpack.c.b16 %v878, %v877
        %v881 = vsel %vm766, %v879, 0
        %883 = vmatpush.bf16.msra.mxu0 0
        %884 = vmatpush.bf16.msra.mxu0 0
        %885 = vmatpush.bf16.msra.mxu0 0
        %886 = vmatpush.bf16.msra.mxu0 0
        %887 = vmatpush.bf16.msra.mxu0 %v861
        %888 = vmatpush.bf16.msra.mxu0 %v859
        %889 = vmatpush.bf16.msra.mxu0 %v857
        %890 = vmatpush.bf16.msra.mxu0 %v855
        %891 = vmatmul.bf16.gmra.mxu0 %v881
        %v892 = vpop.f32.mrf.mxu0
        %v893 = vadd.f32 %v868, %v892
        %v894 = vpop.f32.mrf.mxu0
        %v895 = vadd.f32 %v873, %v894
        %896 = vdwg.mxu0
        %897 = vmatpush.bf16.msra.mxu0 0
        %898 = vmatpush.bf16.msra.mxu0 0
        %899 = vmatpush.bf16.msra.mxu0 0
        %900 = vmatpush.bf16.msra.mxu0 0
        %901 = vmatpush.bf16.msra.mxu0 %v862
        %902 = vmatpush.bf16.msra.mxu0 %v860
        %903 = vmatpush.bf16.msra.mxu0 %v858
        %904 = vmatpush.bf16.msra.mxu0 %v856
        %905 = vmatmul.bf16.gmra.mxu0 %v881
        %v906 = vpop.f32.mrf.mxu0
        %v907 = vadd.f32 %v868, %v906
        %v908 = vpop.f32.mrf.mxu0
        %v909 = vadd.f32 %v873, %v908
        %910 = vdwg.mxu0
        %vm911 = vcmask 1044480
        %v912 = vsel %vm911, %v893, -inf
        %v913 = vrot.slane %v912, 4
        %v914 = vmax.f32 %v912, %v913
        %v915 = vrot.slane %v914, 2
        %v916 = vmax.f32 %v914, %v915
        %v917 = vrot.slane %v916, 1
        %v918 = vmax.f32 %v916, %v917
        %v919 = vsel %vm911, %v907, -inf
        %v920 = vrot.slane %v919, 4
        %v921 = vmax.f32 %v919, %v920
        %v922 = vrot.slane %v921, 2
        %v923 = vmax.f32 %v921, %v922
        %v924 = vrot.slane %v923, 1
        %v925 = vmax.f32 %v923, %v924
        %v926 = vsub.f32 %v893, %v918
        %v927 = vsub.f32 %v907, %v925
        %v928 = vmul.f32 %v926, 1.442695
        %v929 = vpow.pop %v928
        %v930 = vmul.f32 %v927, 1.442695
        %v931 = vpow.pop %v930
        %v932 = vsel %vm911, %v929, 0.0
        %v933 = vrot.slane %v932, 4
        %v934 = vadd.f32 %v932, %v933
        %v935 = vrot.slane %v934, 2
        %v936 = vadd.f32 %v934, %v935
        %v937 = vrot.slane %v936, 1
        %v938 = vadd.f32 %v936, %v937
        %v939 = vsel %vm911, %v931, 0.0
        %v940 = vrot.slane %v939, 4
        %v941 = vadd.f32 %v939, %v940
        %v942 = vrot.slane %v941, 2
        %v943 = vadd.f32 %v941, %v942
        %v944 = vrot.slane %v943, 1
        %v945 = vadd.f32 %v943, %v944
        %v946 = vrcp.pop %v938
        %v947 = vrcp.pop %v945
        %v948 = vmul.f32 %v938, %v946
        %v949 = vmul.f32 %v945, %v947
        %v950 = vsub.f32 2.0, %v948
        %v951 = vsub.f32 2.0, %v949
        %v952 = vmul.f32 %v946, %v950
        %v953 = vmul.f32 %v947, %v951
        %v954 = vmul.f32 %v929, %v952
        %v955 = vmul.f32 %v931, %v953
        %956 = vst [vmem:[%s303] sm:$0x1f] %v954
        %957 = vst [vmem:[%s303 + $0x8] sm:$0x1f] %v955
        %v958 = vmul.f32 %v895, 1.442695
        %v959 = vpow.pop %v958
        %v960 = vmul.f32 %v909, 1.442695
        %v961 = vpow.pop %v960
        %962 = vst [vmem:[%s310] sm:$0x1f] %v959
        %963 = vst [vmem:[%s310 + $0x8] sm:$0x1f] %v961
        %s964 = sand.u32 %s186, 1
        %s965 = scalar_lea.sflag [#allocation3], %s964
        %s966 = sand.u32 %s186, 1
        %s967 = smul.addr %s966, 16
        %s968 = scalar_lea.vmem [#allocation2], %s967
        %s969 = sand.u32 %s212, 1
        %s970 = scalar_lea.sflag [#allocation5], %s969
        %s971 = sand.u32 %s212, 1
        %s972 = smul.addr %s971, 16
        %s973 = scalar_lea.vmem [#allocation4], %s972
        // Predicated region
        $region49: #{tpu_custom_call.1} parent=47 // pred_check
          %p974 = pneg %p196
        $region50: #{tpu_custom_call.1} parent=47 // pred_check_branch
          %976 = sbr.rel (%p974) target = $region52
        $region51: #{tpu_custom_call.1} parent=47 // pred_region
          %s977 = smul.u32 2, %s26
          %979 = vsyncadd %s965, 0
          %s980 = smul.addr %s977, 8
          %s981 = scalar_lea.hbm %s7, %s980
          %s983 = sshll.u32 %s968, 4
          %s984 = int_to_ptr.vmem [resolvable:$true] %s983
          %s985 = sshll.u32 %s981, 4
          %s986 = int_to_ptr.hbm [resolvable:$true] %s985
          %988 = dma.vmem_to_hbm [thread:$0]  %s984, 256, %s986, %s965
        $region52: #{tpu_custom_call.1} parent=47 // pred_fallthru
          _
        // Predicated region
        $region53: #{tpu_custom_call.1} parent=47 // pred_check
          %p989 = pneg %p222
        $region54: #{tpu_custom_call.1} parent=47 // pred_check_branch
          %991 = sbr.rel (%p989) target = $region56
        $region55: #{tpu_custom_call.1} parent=47 // pred_region
          %s992 = smul.u32 2, %s26
          %994 = vsyncadd %s970, 0
          %s995 = smul.addr %s992, 8
          %s996 = scalar_lea.hbm %s8, %s995
          %s998 = sshll.u32 %s973, 4
          %s999 = int_to_ptr.vmem [resolvable:$true] %s998
          %s1000 = sshll.u32 %s996, 4
          %s1001 = int_to_ptr.hbm [resolvable:$true] %s1000
          %1003 = dma.vmem_to_hbm [thread:$0]  %s999, 256, %s1001, %s970
        $region56: #{tpu_custom_call.1} parent=47 // pred_fallthru
          _
      $region48: #{tpu_custom_call.1} parent=5 // pred_fallthru
        _
      %p1004 = scmp.le.s32.totalorder 2, %s21
      // Predicated region
      $region57: #{tpu_custom_call.1} parent=5 // pred_check
        %p1005 = pneg %p1004
      $region58: #{tpu_custom_call.1} parent=5 // pred_check_branch
        %1007 = sbr.rel (%p1005) target = $region60
      $region59: #{tpu_custom_call.1} parent=5 // pred_region
        %s1008 = ssub.s32 %s21, 2
        // Predicated region
        $region61: #{tpu_custom_call.1} parent=59 // pred_check
          %p1009 = pneg %p202
        $region62: #{tpu_custom_call.1} parent=59 // pred_check_branch
          %1011 = sbr.rel (%p1009) target = $region64
        $region63: #{tpu_custom_call.1} parent=59 // pred_region
          %s1012 = sand.u32 %s187, 1
          %s1013 = scalar_lea.sflag [#allocation3], %s1012
          %s1014 = sand.u32 %s187, 1
          %s1015 = smul.addr %s1014, 16
          %s1016 = scalar_lea.vmem [#allocation2], %s1015
          %1018 = dma.done %s1013, 256
        $region64: #{tpu_custom_call.1} parent=59 // pred_fallthru
          _
        // Predicated region
        $region65: #{tpu_custom_call.1} parent=59 // pred_check
          %p1019 = pneg %p228
        $region66: #{tpu_custom_call.1} parent=59 // pred_check_branch
          %1021 = sbr.rel (%p1019) target = $region68
        $region67: #{tpu_custom_call.1} parent=59 // pred_region
          %s1022 = sand.u32 %s213, 1
          %s1023 = scalar_lea.sflag [#allocation5], %s1022
          %s1024 = sand.u32 %s213, 1
          %s1025 = smul.addr %s1024, 16
          %s1026 = scalar_lea.vmem [#allocation4], %s1025
          %1028 = dma.done %s1023, 256
        $region68: #{tpu_custom_call.1} parent=59 // pred_fallthru
          _
      $region60: #{tpu_custom_call.1} parent=5 // pred_fallthru
        _
    $region6: #{tpu_custom_call.1} parent=1 // loop_footer
      %s25 = sadd.s32 1, %s21
    $region7: #{tpu_custom_call.1} parent=1 // loop_footer_branch
      %20 = sbr.rel target = $region3
    $region8: #{tpu_custom_call.1} parent=1 // loop_exit
      _
    %1029 = vsyncpa [#allocation3], 1
    %s1030 = scalar_lea.sflag [#allocation3], 1
    %1031 = vsyncpa %s1030, 1
    %1032 = vsyncpa [#allocation5], 1
    %s1033 = scalar_lea.sflag [#allocation5], 1
    %1034 = vsyncpa %s1033, 1

</llo_original>
